<compile_context>
chip_gen: v7x
topology: tpu7x:2x2x1
jax: 0.10.0
libtpu: 0.0.40
codegen_flags: <defaults>
</compile_context>

<pallas_src>
import jax
import jax.numpy as jnp
from jax import lax
from jax.experimental import pallas as pl
from jax.experimental.pallas import tpu as pltpu


def _round_up(x, m):
    return (x + m - 1) // m * m


# ----------------------------------------------------------------------------
# Pallas kernels: tiled MXU matmul  out[M, N] = A[M, K] @ B[K, N]
# ----------------------------------------------------------------------------
def _matmul_kernel_out_acc(a_ref, b_ref, o_ref):
    """f32 output: accumulate directly into the grid-resident output block
    (out BlockSpec returns the same (i, j) tile across the K axis), so no
    separate VMEM scratch accumulator or finalize copy is needed."""
    @pl.when(pl.program_id(2) == 0)
    def _():
        o_ref[...] = jnp.zeros_like(o_ref)

    o_ref[...] += jnp.dot(a_ref[...], b_ref[...],
                          preferred_element_type=jnp.float32)


def _matmul_kernel_scratch_acc(a_ref, b_ref, o_ref, acc_ref):
    """Narrow (bf16 etc.) output: f32 VMEM scratch accumulator with
    pl.when-gated init / finalize (P3 pattern)."""
    @pl.when(pl.program_id(2) == 0)
    def _():
        acc_ref[...] = jnp.zeros_like(acc_ref)

    acc_ref[...] += jnp.dot(a_ref[...], b_ref[...],
                            preferred_element_type=jnp.float32)

    @pl.when(pl.program_id(2) == pl.num_programs(2) - 1)
    def _():
        o_ref[...] = acc_ref[...].astype(o_ref.dtype)


def _im2col(x_pad_nhwc, kh, kw, stride, h_out, w_out):
    """(N, Hp, Wp, Cin) -> (N*Hout*Wout, KH*KW*Cin), tap-major then channel."""
    n, _, _, c_in = x_pad_nhwc.shape
    cols = []
    for i in range(kh):
        for j in range(kw):
            cols.append(lax.slice(
                x_pad_nhwc,
                (0, i, j, 0),
                (n, i + (h_out - 1) * stride + 1,
                 j + (w_out - 1) * stride + 1, c_in),
                (1, stride, stride, 1)))
    patches = jnp.concatenate(cols, axis=-1)   # (N, Hout, Wout, KH*KW*Cin)
    return patches.reshape(n * h_out * w_out, kh * kw * c_in)


def _tpu_budget():
    """Per-generation tile targets / VMEM ceiling.

    v5e/v6e have 128 MiB of VMEM per TensorCore -> large tiles, high scoped
    limit; v7x has only 64 MiB -> cap tiles/limit to leave Mosaic scratch
    headroom.
    """
    try:
        vmem_cap = int(pltpu.get_tpu_info().vmem_capacity_bytes)
    except Exception:
        vmem_cap = 64 * 1024 * 1024  # conservative (v7x-sized) fallback
    if vmem_cap >= 100 * (1 << 20):
        return dict(tm=512, tn=512, tk_max=4096, vmem_ceiling=100 << 20)
    return dict(tm=512, tn=512, tk_max=2048, vmem_ceiling=48 << 20)


def conv2d_pallas(x_nchw, weight_oihw, *, stride=1, padding=1, dilation=1,
                  groups=1, tile_m=None, tile_n=None, max_k_block=None):
    """Conv2d matching torch.nn.functional.conv2d semantics (NCHW in/out).

    bf16 MXU operands with f32 accumulation (same recipe as production TPU
    convs); output returned in the input dtype.
    """
    assert dilation == 1 and groups == 1, "demo config uses dilation=1, groups=1"
    n, c_in, h_in, w_in = x_nchw.shape
    c_out, c_in_w, kh, kw = weight_oihw.shape
    assert c_in_w == c_in

    h_out = (h_in + 2 * padding - dilation * (kh - 1) - 1) // stride + 1
    w_out = (w_in + 2 * padding - dilation * (kw - 1) - 1) // stride + 1

    budget = _tpu_budget()
    tm_t = tile_m if tile_m is not None else budget["tm"]
    tn_t = tile_n if tile_n is not None else budget["tn"]
    tk_max = max_k_block if max_k_block is not None else budget["tk_max"]
    tk_max = max(128, (tk_max // 128) * 128)          # always a 128-multiple

    # --- K-block / channel-pad strategy -------------------------------------
    k_raw = kh * kw * c_in
    if k_raw <= tk_max:
        # Whole contraction in one K block (BlockSpec "equals full dim"
        # exception): no pre- or post-im2col K padding at all.
        c_in_p = c_in
        tk = k_raw
    else:
        # Pad Cin *before* im2col (on the raw activation, KH*KW x cheaper than
        # padding the expanded patch matrix) so K is a multiple of a
        # 128-aligned tk that divides it exactly.
        c_in_p = _round_up(c_in, 128)
        tk = kh * kw * 128
        if tk > tk_max:
            tk = tk_max
            # TODO(synk): for very large kernels fold im2col into the Pallas
            # kernel (taps grid axis / manual DMA gather) so the post-pad of
            # the expanded patch matrix below is never needed.

    # --- wrapper-side layout work (XLA): NCHW->NHWC, halo+channel pad, im2col
    x_nhwc = jnp.transpose(x_nchw, (0, 2, 3, 1))
    x_pad = jnp.pad(x_nhwc, ((0, 0), (padding, padding),
                             (padding, padding), (0, c_in_p - c_in)))

    a = _im2col(x_pad, kh, kw, stride, h_out, w_out).astype(jnp.bfloat16)
    # weight OIHW -> (KH, KW, Cin, Cout) -> (KH*KW*Cin, Cout); matches the
    # tap-major-then-channel column ordering produced by _im2col.
    w_p = jnp.pad(weight_oihw, ((0, 0), (0, c_in_p - c_in), (0, 0), (0, 0)))
    b = jnp.transpose(w_p, (2, 3, 1, 0)).reshape(kh * kw * c_in_p, c_out)
    b = b.astype(jnp.bfloat16)

    m_dim, k_dim = a.shape
    n_dim = c_out

    # --- tiling --------------------------------------------------------------
    # Lane-dense output (tn multiple of 128, up to 512 to feed 256-wide MXUs),
    # capped so a tiny Cout (demo: 8) does not over-pad.
    # TODO(synk): for Cout << 128 padded lanes still dominate B/out traffic;
    # production would batch several small heads or fall back to XLA's conv.
    tn = min(tn_t, _round_up(n_dim, 128))
    # tm multiple of 16: bf16 A packs two rows per sublane.
    tm = min(tm_t, _round_up(m_dim, 16))

    m_pad = _round_up(m_dim, tm)
    k_pad = _round_up(k_dim, tk)
    n_pad = _round_up(n_dim, tn)

    # Give both v7x TensorCores work when the "parallel" grid would be 1x1.
    if m_pad // tm == 1 and n_pad // tn == 1 and tm % 32 == 0 and m_dim >= 32:
        tm //= 2
        m_pad = _round_up(m_dim, tm)

    # Pads below are no-ops in the common (and demo) case: Cin was padded
    # pre-im2col, tk divides K, and tm was derived from m_dim.
    if (m_pad, k_pad) != (m_dim, k_dim):
        a = jnp.pad(a, ((0, m_pad - m_dim), (0, k_pad - k_dim)))
    if (k_pad, n_pad) != (k_dim, n_dim):
        b = jnp.pad(b, ((0, k_pad - k_dim), (0, n_pad - n_dim)))

    grid = (m_pad // tm, n_pad // tn, k_pad // tk)

    out_dtype = jnp.dtype(x_nchw.dtype)
    out_itemsize = out_dtype.itemsize
    direct_acc = out_dtype == jnp.dtype(jnp.float32)

    if direct_acc:
        kernel = _matmul_kernel_out_acc
        scratch_shapes = []
        acc_bytes = 0
    else:
        kernel = _matmul_kernel_scratch_acc
        scratch_shapes = [pltpu.VMEM((tm, tn), jnp.float32)]
        acc_bytes = tm * tn * 4

    # VMEM limit from the actual tile footprint (double-buffered bf16 A/B
    # tiles, double-buffered output tile, optional f32 scratch) + headroom,
    # capped per generation so Mosaic internal scratch always has room.
    footprint = (2 * (tm * tk + tk * tn) * 2
                 + 2 * tm * tn * out_itemsize
                 + acc_bytes)
    vmem_limit = int(min(budget["vmem_ceiling"], footprint + (16 << 20)))

    cost = pl.CostEstimate(
        flops=2 * m_pad * n_pad * k_pad,
        transcendentals=0,
        bytes_accessed=(m_pad * k_pad * 2 + k_pad * n_pad * 2
                        + m_pad * n_pad * out_itemsize))

    out = pl.pallas_call(
        kernel,
        out_shape=jax.ShapeDtypeStruct((m_pad, n_pad), out_dtype),
        grid_spec=pltpu.PrefetchScalarGridSpec(
            num_scalar_prefetch=0,
            grid=grid,
            in_specs=[
                pl.BlockSpec((tm, tk), lambda i, j, k: (i, k)),
                pl.BlockSpec((tk, tn), lambda i, j, k: (k, j)),
            ],
            out_specs=pl.BlockSpec((tm, tn), lambda i, j, k: (i, j)),
            scratch_shapes=scratch_shapes,
        ),
        compiler_params=pltpu.CompilerParams(
            dimension_semantics=("parallel", "parallel", "arbitrary"),
            vmem_limit_bytes=vmem_limit),
        cost_estimate=cost,
    )(a, b)

    # --- wrapper-side epilogue: drop padding, back to NCHW -------------------
    out = out[:m_dim, :c_out].reshape(n, h_out, w_out, c_out)
    return jnp.transpose(out, (0, 3, 1, 2))


# ----------------------------------------------------------------------------
# Module-level glue mirroring FlopConv / BaseConv bookkeeping
# ----------------------------------------------------------------------------
def get_normalized(alpha, margin=0.0):
    alphas = jax.nn.softmax(alpha, axis=-1)
    return alphas / (alphas.sum() + margin)


class BaseConvPallas:
    """JAX/Pallas port of BaseConv (holding a FlopConv)."""

    def __init__(self, in_channels, out_channels, kernel_size, stride, padding,
                 dilation, groups, bias, bits, key):
        assert not bias, "demo config uses bias=False (FlopConv flops ignore bias)"
        self.in_channels = in_channels
        self.out_channels = out_channels
        self.kernel = (kernel_size, kernel_size)
        self.stride = stride
        self.padding = padding
        self.dilation = dilation
        self.groups = groups
        self.bits = bits
        # alphas = ones(len(bits)) / len(bits)
        self.alphas = jnp.ones((len(bits),), jnp.float32) / len(bits)
        # deterministic conv weight init, PyTorch OIHW shape
        k = 1.0 / (in_channels * kernel_size * kernel_size)
        self.weight = jax.random.uniform(
            key, (out_channels, in_channels // groups, kernel_size, kernel_size),
            minval=-k ** 0.5, maxval=k ** 0.5, dtype=jnp.float32)
        self.bias = None
        self.param_size = (2 * in_channels * out_channels *
                           self.kernel[0] * self.kernel[1] / groups)
        self.flops = 0.0
        self.memory_size = 0.0

    # FlopConv.forward equivalent (BaseConv.forward itself is abstract).
    # TODO(synk): BaseConv.forward raises NotImplementedError in the reference;
    # subclasses call self.conv(x, weights) - that conv path is what we port.
    def conv_forward(self, x_nchw):
        out = conv2d_pallas(x_nchw, self.weight, stride=self.stride,
                            padding=self.padding, dilation=self.dilation,
                            groups=self.groups)
        # reference names these (w_out, h_out) even though output is NCHW;
        # only the product matters for the flops bookkeeping.
        h_out, w_out = out.shape[2], out.shape[3]
        c_in, h_in, w_in = x_nchw.shape[1], x_nchw.shape[2], x_nchw.shape[3]
        self.memory_size = float(c_in * h_in * w_in)
        self.flops = float(self.param_size * h_out * w_out)
        return out

    def _fetch_info(self):
        bit_ops, mem = 0.0, 0.0
        alphas = get_normalized(self.alphas)
        for bit, alpha in zip(self.bits, alphas):
            bit_ops += float(alpha) * self.flops * bit ** 2 / 2
            mem += float(alpha) * self.memory_size * bit
        return bit_ops, mem

    def get_bit(self):
        return self.bits[int(jnp.argmax(self.alphas))]

    def get_weight(self):
        return self.weight, self.bias

    def _get_arch_values(self):
        return self.get_bit(), get_normalized(self.alphas)


# ----------------------------------------------------------------------------
if __name__ == "__main__":
    key = jax.random.PRNGKey(0)
    kx, kw = jax.random.split(key)

    N, C_IN, C_OUT, H, W = 2, 4, 8, 16, 16
    module = BaseConvPallas(
        in_channels=C_IN, out_channels=C_OUT, kernel_size=3, stride=1,
        padding=1, dilation=1, groups=1, bias=False, bits=(2, 4, 8), key=kw)

    x = jax.random.normal(kx, (N, C_IN, H, W), dtype=jnp.float32)

    out = module.conv_forward(x)
    out = jax.block_until_ready(out)
    assert out.shape == (N, C_OUT, H, W)
    assert out.dtype == jnp.float32

    # correctness check 1: against an XLA conv on the same bf16-rounded
    # operands (isolates MXU bf16 input rounding; accumulation is f32 in both)
    x_bf = x.astype(jnp.bfloat16).astype(jnp.float32)
    w_bf = module.weight.astype(jnp.bfloat16).astype(jnp.float32)
    ref_bf16 = lax.conv_general_dilated(
        x_bf, w_bf, window_strides=(1, 1), padding=((1, 1), (1, 1)),
        dimension_numbers=("NCHW", "OIHW", "NCHW"))
    assert jnp.allclose(out, ref_bf16, atol=1e-4, rtol=1e-4)

    # correctness check 2: loose check against the full-f32 reference
    ref_f32 = lax.conv_general_dilated(
        x, module.weight, window_strides=(1, 1), padding=((1, 1), (1, 1)),
        dimension_numbers=("NCHW", "OIHW", "NCHW"))
    assert jnp.allclose(out, ref_f32, atol=3e-2, rtol=3e-2)

    # exercise the bookkeeping path as well
    _ = module._fetch_info()
    _ = module.get_bit()
    _ = module._get_arch_values()
    _ = get_normalized(module.alphas)

    print("KERNEL_OK")
</pallas_src>

<mosaic_0001>
module attributes {stable_mosaic.version = 11 : i64} {
  func.func @_matmul_kernel_out_acc(%arg0: i32, %arg1: i32, %arg2: i32, %arg3: memref<256x36xbf16, #tpu.memory_space<vmem>>, %arg4: memref<36x128xbf16, #tpu.memory_space<vmem>>, %arg5: memref<256x128xf32, #tpu.memory_space<vmem>>) attributes {dimension_semantics = [#tpu.dimension_semantics<parallel>, #tpu.dimension_semantics<parallel>, #tpu.dimension_semantics<arbitrary>], iteration_bounds = array<i64: 2, 1, 1>, scalar_prefetch = 0 : i64, scratch_operands = 0 : i64, tpu.core_type = #tpu.core_type<tc>, window_params = [{transform_indices = @transform_0, window_bounds = array<i64: 256, 36>}, {transform_indices = @transform_1, window_bounds = array<i64: 36, 128>}, {transform_indices = @transform_2, window_bounds = array<i64: 256, 128>}]} {
    %c0_i32 = arith.constant 0 : i32
    %0 = arith.cmpi eq, %arg2, %c0_i32 : i32
    %1 = arith.extui %0 : i1 to i32
    %c0_i32_0 = arith.constant 0 : i32
    %2 = arith.cmpi ne, %1, %c0_i32_0 : i32
    scf.if %2 {
      %cst_8 = arith.constant 0.000000e+00 : f32
      %9 = vector.broadcast %cst_8 : f32 to vector<256x128xf32>
      %c0_9 = arith.constant 0 : index
      %c0_10 = arith.constant 0 : index
      %10 = vector.load %arg5[%c0_9, %c0_10] : memref<256x128xf32, #tpu.memory_space<vmem>>, vector<256x128xf32>
      tpu.vector_store %arg5[%c0_9, %c0_10], %9 {strides = array<i32>} : memref<256x128xf32, #tpu.memory_space<vmem>>, vector<256x128xf32>,
    } else {
    }
    %c0 = arith.constant 0 : index
    %c0_1 = arith.constant 0 : index
    %3 = vector.load %arg5[%c0, %c0_1] : memref<256x128xf32, #tpu.memory_space<vmem>>, vector<256x128xf32>
    %c0_2 = arith.constant 0 : index
    %c0_3 = arith.constant 0 : index
    %4 = vector.load %arg3[%c0_2, %c0_3] : memref<256x36xbf16, #tpu.memory_space<vmem>>, vector<256x36xbf16>
    %c0_4 = arith.constant 0 : index
    %c0_5 = arith.constant 0 : index
    %5 = vector.load %arg4[%c0_4, %c0_5] : memref<36x128xbf16, #tpu.memory_space<vmem>>, vector<36x128xbf16>
    %cst = arith.constant dense<0.000000e+00> : vector<256x128xf32>
    %6 = tpu.matmul %4, %5, %cst {dimension_numbers = #tpu.dot_dimension_numbers<[1], [0], [0], [1], [0, 0, 1, 1], [], []>} : vector<256x36xbf16>, vector<36x128xbf16>, vector<256x128xf32> -> vector<256x128xf32>
    %7 = arith.addf %3, %6 : vector<256x128xf32>
    %c0_6 = arith.constant 0 : index
    %c0_7 = arith.constant 0 : index
    %8 = vector.load %arg5[%c0_6, %c0_7] : memref<256x128xf32, #tpu.memory_space<vmem>>, vector<256x128xf32>
    tpu.vector_store %arg5[%c0_6, %c0_7], %7 {strides = array<i32>} : memref<256x128xf32, #tpu.memory_space<vmem>>, vector<256x128xf32>,
    return
  }
  func.func @transform_0(%arg0: i32, %arg1: i32, %arg2: i32) -> (i32, i32) {
    %c0_i32 = arith.constant 0 : i32
    return %arg0, %arg2 : i32, i32
  }
  func.func @transform_1(%arg0: i32, %arg1: i32, %arg2: i32) -> (i32, i32) {
    %c0_i32 = arith.constant 0 : i32
    return %arg2, %arg1 : i32, i32
  }
  func.func @transform_2(%arg0: i32, %arg1: i32, %arg2: i32) -> (i32, i32) {
    %c0_i32 = arith.constant 0 : i32
    return %arg0, %arg1 : i32, i32
  }
}

</mosaic_0001>

<llo_original>
// kernel: tpu_custom_call.1
$region0: #{tpu_custom_call.1}
  #allocation0 [shape = 'u32[]', space=smem, size = 0x4, offset = 0x4, fixed_abs, tag = 'smem constant byte address 0x4 - core index']
  #allocation1 [shape = 'u32[144,128]{1,0:T(1,128)}', space=vmem, size = 0x12000, scoped, tag = 'internal scratch']
  %s0 = inlined_call_operand.vmem [shape: bf16[512,36], index: 0, kind: input, shape index: {}]
  %s1 = inlined_call_operand.vmem [shape: bf16[36,128], index: 1, kind: input, shape index: {}]
  %s2 = inlined_call_operand.hbm [shape: f32[512,128], index: 2, kind: output, shape index: {}]
  %s3 = sld [smem:[#allocation0]]
  $region45: #{tpu_custom_call.1} parent=0
    _
  %s5 = ssub.s32 1, %s3
  %s6 = scalar_select 0, %s5, %s3
  $region1: #{tpu_custom_call.1} parent=0
    #allocation2 [shape = 'u8[262144]{0}', space=vmem, size = 0x40000, scoped, tag = 'output window, operand 0']
    #allocation3 [shape = 's32[2]{0}', space=sflag, size = 0x8, scoped, tag = 'scoped memory for tpu_custom_call.1']
    %7 = vsyncpa [#allocation3], 0
    %s8 = scalar_lea.sflag [#allocation3], 1
    %9 = vsyncpa %s8, 0
    loop: start=0, step=1, limit=4
    $region2: #{tpu_custom_call.1} parent=1 // loop_pre_header
      _
    $region3: #{tpu_custom_call.1} parent=1 // loop_header
      %s11 = sphi 0, %s15
      %p12 = scmp.ge.s32.totalorder %s11, 4
      %s18 = sphi 0, %s37
      %s19 = sphi 0, %s33
      %s20 = sphi 0, %s29
      %s21 = sphi 0, %s18
      %s22 = sphi 0, %s19
      %s23 = sphi 0, %s20
      %s24 = sphi 0, %s21
      %s25 = sphi 0, %s22
      %s26 = sphi 0, %s23
      %s42 = sphi 0, %s44
      %s45 = sphi 0, %s42
      %s46 = sphi 0, %s45
      %s62 = sphi 0, %s46
      %s70 = sphi 0, %s72
      %s73 = sphi 0, %s70
      %s74 = sphi 0, %s73
      %s90 = sphi 0, %s74
      %s98 = sphi 0, %s100
      %s101 = sphi 0, %s98
      %s102 = sphi 0, %s101
      %s118 = sphi 0, %s102
    $region4: #{tpu_custom_call.1} parent=1 // loop_header_branch
      %14 = sbr.rel (%p12) target = $region8
    $region5: #{tpu_custom_call.1} parent=1 // loop_body
      %s16 = ssub.s32 %s11, 1
      %s17 = ssub.s32 %s11, 2
      %s27 = sadd.s32 1, %s20
      %p28 = scmp.ge.s32.totalorder %s27, 1
      %s29 = scalar_select %p28, 0, %s27
      %s30 = sadd.s32 1, %s19
      %s31 = scalar_select %p28, %s30, %s19
      %p32 = scmp.ge.s32.totalorder %s31, 1
      %s33 = scalar_select %p32, 0, %s31
      %s34 = sadd.s32 1, %s18
      %s35 = scalar_select %p32, %s34, %s18
      %p36 = scmp.ge.s32.totalorder %s35, 2
      %s37 = scalar_select %p36, 0, %s35
      %s38 = ssub.s32 %s18, %s37
      %s39 = ssub.s32 %s20, %s29
      %s40 = sor.u32 %s38, %s39
      %p41 = scmp.eq.s32.totalorder %s40, 0
      %s43 = sadd.s32 %s42, 1
      %s44 = scalar_select %p41, %s42, %s43
      %p47 = pneg %p41
      %p48 = scmp.eq.s32.totalorder %s11, 1
      %p49 = por %p47, %p48
      %p50 = scmp.ne.s32.totalorder %s42, %s45
      %p51 = scmp.eq.s32.totalorder %s11, 0
      %p52 = por %p50, %p51
      %p53 = scmp.ne.s32.totalorder %s42, %s45
      %p54 = scmp.eq.s32.totalorder %s16, 1
      %p55 = por %p53, %p54
      %p56 = scmp.ne.s32.totalorder %s45, %s46
      %p57 = scmp.eq.s32.totalorder %s16, 0
      %p58 = por %p56, %p57
      %p59 = scmp.ne.s32.totalorder %s45, %s46
      %p60 = scmp.eq.s32.totalorder %s17, 1
      %p61 = por %p59, %p60
      %p63 = scmp.ne.s32.totalorder %s46, %s62
      %p64 = scmp.eq.s32.totalorder %s17, 0
      %p65 = por %p63, %p64
      %s66 = ssub.s32 %s20, %s29
      %s67 = ssub.s32 %s19, %s33
      %s68 = sor.u32 %s66, %s67
      %p69 = scmp.eq.s32.totalorder %s68, 0
      %s71 = sadd.s32 %s70, 1
      %s72 = scalar_select %p69, %s70, %s71
      %p75 = pneg %p69
      %p76 = scmp.eq.s32.totalorder %s11, 1
      %p77 = por %p75, %p76
      %p78 = scmp.ne.s32.totalorder %s70, %s73
      %p79 = scmp.eq.s32.totalorder %s11, 0
      %p80 = por %p78, %p79
      %p81 = scmp.ne.s32.totalorder %s70, %s73
      %p82 = scmp.eq.s32.totalorder %s16, 1
      %p83 = por %p81, %p82
      %p84 = scmp.ne.s32.totalorder %s73, %s74
      %p85 = scmp.eq.s32.totalorder %s16, 0
      %p86 = por %p84, %p85
      %p87 = scmp.ne.s32.totalorder %s73, %s74
      %p88 = scmp.eq.s32.totalorder %s17, 1
      %p89 = por %p87, %p88
      %p91 = scmp.ne.s32.totalorder %s74, %s90
      %p92 = scmp.eq.s32.totalorder %s17, 0
      %p93 = por %p91, %p92
      %s94 = ssub.s32 %s18, %s37
      %s95 = ssub.s32 %s19, %s33
      %s96 = sor.u32 %s94, %s95
      %p97 = scmp.eq.s32.totalorder %s96, 0
      %s99 = sadd.s32 %s98, 1
      %s100 = scalar_select %p97, %s98, %s99
      %p103 = pneg %p97
      %p104 = scmp.eq.s32.totalorder %s11, 1
      %p105 = por %p103, %p104
      %p106 = scmp.ne.s32.totalorder %s98, %s101
      %p107 = scmp.eq.s32.totalorder %s11, 0
      %p108 = por %p106, %p107
      %p109 = scmp.ne.s32.totalorder %s98, %s101
      %p110 = scmp.eq.s32.totalorder %s16, 1
      %p111 = por %p109, %p110
      %p112 = scmp.ne.s32.totalorder %s101, %s102
      %p113 = scmp.eq.s32.totalorder %s16, 0
      %p114 = por %p112, %p113
      %p115 = scmp.ne.s32.totalorder %s101, %s102
      %p116 = scmp.eq.s32.totalorder %s17, 1
      %p117 = por %p115, %p116
      %p119 = scmp.ne.s32.totalorder %s102, %s118
      %p120 = scmp.eq.s32.totalorder %s17, 0
      %p121 = por %p119, %p120
      %p122 = scmp.le.s32.totalorder 1, %s11
      %p123 = scmp.lt.s32.totalorder %s11, 3
      %p124 = pnand %p122, %p123
      %p125 = pneg %p124
      // Predicated region
      $region9: #{tpu_custom_call.1} parent=5 // pred_check
        _
      $region10: #{tpu_custom_call.1} parent=5 // pred_check_branch
        %127 = sbr.rel (%p124) target = $region12
      $region11: #{tpu_custom_call.1} parent=5 // pred_region
        %s128 = ssub.s32 %s11, 1
        // Predicated region
        $region13: #{tpu_custom_call.1} parent=11 // pred_check
          %p129 = pneg %p86
        $region14: #{tpu_custom_call.1} parent=11 // pred_check_branch
          %131 = sbr.rel (%p129) target = $region16
        $region15: #{tpu_custom_call.1} parent=11 // pred_region
          %s132 = smul.u32 5, %s23
          %p133 = scmp.lt.s32.totalorder %s132, 4
          %s134 = scalar_select %p133, %s132, 4
          %p135 = scmp.lt.s32.totalorder %s22, 0
          %s136 = scalar_select %p135, %s22, 0
          %s137 = sadd.s32 %s136, %s134
          %s138 = smul.addr %s137, 4
          %s139 = scalar_lea.vmem %s1, %s138
          %s140 = smul.u32 5, %s23
        $region16: #{tpu_custom_call.1} parent=11 // pred_fallthru
          _
      $region12: #{tpu_custom_call.1} parent=5 // pred_fallthru
        _
      %p141 = scmp.lt.s32.totalorder %s11, 2
      // Predicated region
      $region17: #{tpu_custom_call.1} parent=5 // pred_check
        %p142 = pneg %p141
      $region18: #{tpu_custom_call.1} parent=5 // pred_check_branch
        %144 = sbr.rel (%p142) target = $region20
      $region19: #{tpu_custom_call.1} parent=5 // pred_region
        // Predicated region
        $region21: #{tpu_custom_call.1} parent=19 // pred_check
          %p145 = pneg %p52
        $region22: #{tpu_custom_call.1} parent=19 // pred_check_branch
          %147 = sbr.rel (%p145) target = $region24
        $region23: #{tpu_custom_call.1} parent=19 // pred_region
          %s148 = smul.u32 32, %s18
          %p149 = scmp.lt.s32.totalorder %s148, 63
          %s150 = scalar_select %p149, %s148, 63
          %p151 = scmp.lt.s32.totalorder %s20, 0
          %s152 = scalar_select %p151, %s20, 0
          %s153 = sadd.s32 %s152, %s150
          %s154 = smul.addr %s153, 4
          %s155 = scalar_lea.vmem %s0, %s154
          %s156 = smul.u32 32, %s18
        $region24: #{tpu_custom_call.1} parent=19 // pred_fallthru
          _
      $region20: #{tpu_custom_call.1} parent=5 // pred_fallthru
        _
      %p157 = scmp.le.s32.totalorder 1, %s11
      %p158 = scmp.lt.s32.totalorder %s11, 3
      %p159 = pnand %p157, %p158
      %p160 = pneg %p159
      // Predicated region
      $region25: #{tpu_custom_call.1} parent=5 // pred_check
        _
      $region26: #{tpu_custom_call.1} parent=5 // pred_check_branch
        %162 = sbr.rel (%p159) target = $region28
      $region27: #{tpu_custom_call.1} parent=5 // pred_region
        %s163 = ssub.s32 %s11, 1
        %s164 = smul.u32 32, %s21
        %p165 = scmp.lt.s32.totalorder %s164, 63
        %s166 = scalar_select %p165, %s164, 63
        %p167 = scmp.lt.s32.totalorder %s23, 0
        %s168 = scalar_select %p167, %s23, 0
        %s169 = sadd.s32 %s168, %s166
        %s170 = smul.addr %s169, 4
        %s171 = scalar_lea.vmem %s0, %s170
        %p172 = pneg %p58
        %p173 = pneg %p55
        %s174 = smul.u32 5, %s23
        %p175 = scmp.lt.s32.totalorder %s174, 4
        %s176 = scalar_select %p175, %s174, 4
        %p177 = scmp.lt.s32.totalorder %s22, 0
        %s178 = scalar_select %p177, %s22, 0
        %s179 = sadd.s32 %s178, %s176
        %s180 = smul.addr %s179, 4
        %s181 = scalar_lea.vmem %s1, %s180
        %p182 = pneg %p86
        %p183 = pneg %p83
        %p184 = pneg %p114
        %p185 = pneg %p111
        %s186 = sand.u32 %s101, 1
        %s187 = scalar_lea.sflag [#allocation3], %s186
        %s188 = sand.u32 %s101, 1
        %s189 = smul.addr %s188, 256
        %s190 = scalar_lea.vmem [#allocation2], %s189
        %s191 = smul.u32 32, %s21
        %p192 = scmp.lt.s32.totalorder %s191, 63
        %s193 = scalar_select %p192, %s191, 63
        %p194 = scmp.lt.s32.totalorder %s23, 0
        %s195 = scalar_select %p194, %s23, 0
        %s196 = sadd.s32 %s195, %s193
        %s197 = smul.addr %s196, 4
        %s198 = scalar_lea.vmem %s0, %s197
        %s199 = smul.u32 32, %s21
        %s200 = smul.u32 5, %s23
        %p201 = scmp.lt.s32.totalorder %s200, 4
        %s202 = scalar_select %p201, %s200, 4
        %p203 = scmp.lt.s32.totalorder %s22, 0
        %s204 = scalar_select %p203, %s22, 0
        %s205 = sadd.s32 %s204, %s202
        %s206 = smul.addr %s205, 4
        %s207 = scalar_lea.vmem %s1, %s206
        %s208 = smul.u32 5, %s23
        %s209 = smul.u32 32, %s21
        %p211 = scmp.eq.s32.totalorder %s23, 0
        // Predicated region
        $region29: #{tpu_custom_call.1} parent=27 // pred_check
          %p212 = pneg %p211
        $region30: #{tpu_custom_call.1} parent=27 // pred_check_branch
          %214 = sbr.rel (%p212) target = $region32
        $region31: #{tpu_custom_call.1} parent=27 // pred_region
          %215 = vst [vmem:[%s190] sm:$0xff] 0.0
          %216 = vst [vmem:[%s190 + $0x8] sm:$0xff] 0.0
          %217 = vst [vmem:[%s190 + $0x10] sm:$0xff] 0.0
          %218 = vst [vmem:[%s190 + $0x18] sm:$0xff] 0.0
          %219 = vst [vmem:[%s190 + $0x20] sm:$0xff] 0.0
          %220 = vst [vmem:[%s190 + $0x28] sm:$0xff] 0.0
          %221 = vst [vmem:[%s190 + $0x30] sm:$0xff] 0.0
          %222 = vst [vmem:[%s190 + $0x38] sm:$0xff] 0.0
          %223 = vst [vmem:[%s190 + $0x40] sm:$0xff] 0.0
          %224 = vst [vmem:[%s190 + $0x48] sm:$0xff] 0.0
          %225 = vst [vmem:[%s190 + $0x50] sm:$0xff] 0.0
          %226 = vst [vmem:[%s190 + $0x58] sm:$0xff] 0.0
          %227 = vst [vmem:[%s190 + $0x60] sm:$0xff] 0.0
          %228 = vst [vmem:[%s190 + $0x68] sm:$0xff] 0.0
          %229 = vst [vmem:[%s190 + $0x70] sm:$0xff] 0.0
          %230 = vst [vmem:[%s190 + $0x78] sm:$0xff] 0.0
          %231 = vst [vmem:[%s190 + $0x80] sm:$0xff] 0.0
          %232 = vst [vmem:[%s190 + $0x88] sm:$0xff] 0.0
          %233 = vst [vmem:[%s190 + $0x90] sm:$0xff] 0.0
          %234 = vst [vmem:[%s190 + $0x98] sm:$0xff] 0.0
          %235 = vst [vmem:[%s190 + $0xa0] sm:$0xff] 0.0
          %236 = vst [vmem:[%s190 + $0xa8] sm:$0xff] 0.0
          %237 = vst [vmem:[%s190 + $0xb0] sm:$0xff] 0.0
          %238 = vst [vmem:[%s190 + $0xb8] sm:$0xff] 0.0
          %239 = vst [vmem:[%s190 + $0xc0] sm:$0xff] 0.0
          %240 = vst [vmem:[%s190 + $0xc8] sm:$0xff] 0.0
          %241 = vst [vmem:[%s190 + $0xd0] sm:$0xff] 0.0
          %242 = vst [vmem:[%s190 + $0xd8] sm:$0xff] 0.0
          %243 = vst [vmem:[%s190 + $0xe0] sm:$0xff] 0.0
          %244 = vst [vmem:[%s190 + $0xe8] sm:$0xff] 0.0
          %245 = vst [vmem:[%s190 + $0xf0] sm:$0xff] 0.0
          %246 = vst [vmem:[%s190 + $0xf8] sm:$0xff] 0.0
        $region32: #{tpu_custom_call.1} parent=27 // pred_fallthru
          _
        %v247 = vld [vmem:[%s190] sm:$0xff]
        %v248 = vld [vmem:[%s190 + $0x8] sm:$0xff]
        %v249 = vld [vmem:[%s190 + $0x10] sm:$0xff]
        %v250 = vld [vmem:[%s190 + $0x18] sm:$0xff]
        %v251 = vld [vmem:[%s190 + $0x20] sm:$0xff]
        %v252 = vld [vmem:[%s190 + $0x28] sm:$0xff]
        %v253 = vld [vmem:[%s190 + $0x30] sm:$0xff]
        %v254 = vld [vmem:[%s190 + $0x38] sm:$0xff]
        %v255 = vld [vmem:[%s190 + $0x40] sm:$0xff]
        %v256 = vld [vmem:[%s190 + $0x48] sm:$0xff]
        %v257 = vld [vmem:[%s190 + $0x50] sm:$0xff]
        %v258 = vld [vmem:[%s190 + $0x58] sm:$0xff]
        %v259 = vld [vmem:[%s190 + $0x60] sm:$0xff]
        %v260 = vld [vmem:[%s190 + $0x68] sm:$0xff]
        %v261 = vld [vmem:[%s190 + $0x70] sm:$0xff]
        %v262 = vld [vmem:[%s190 + $0x78] sm:$0xff]
        %v263 = vld [vmem:[%s190 + $0x80] sm:$0xff]
        %v264 = vld [vmem:[%s190 + $0x88] sm:$0xff]
        %v265 = vld [vmem:[%s190 + $0x90] sm:$0xff]
        %v266 = vld [vmem:[%s190 + $0x98] sm:$0xff]
        %v267 = vld [vmem:[%s190 + $0xa0] sm:$0xff]
        %v268 = vld [vmem:[%s190 + $0xa8] sm:$0xff]
        %v269 = vld [vmem:[%s190 + $0xb0] sm:$0xff]
        %v270 = vld [vmem:[%s190 + $0xb8] sm:$0xff]
        %v271 = vld [vmem:[%s190 + $0xc0] sm:$0xff]
        %v272 = vld [vmem:[%s190 + $0xc8] sm:$0xff]
        %v273 = vld [vmem:[%s190 + $0xd0] sm:$0xff]
        %v274 = vld [vmem:[%s190 + $0xd8] sm:$0xff]
        %v275 = vld [vmem:[%s190 + $0xe0] sm:$0xff]
        %v276 = vld [vmem:[%s190 + $0xe8] sm:$0xff]
        %v277 = vld [vmem:[%s190 + $0xf0] sm:$0xff]
        %v278 = vld [vmem:[%s190 + $0xf8] sm:$0xff]
        %v279 = vld [vmem:[%s198] sm:$0xf]
        %v280 = vld [vmem:[%s198 + $0x4] sm:$0xf]
        %v281 = vld [vmem:[%s198 + $0x8] sm:$0xf]
        %v282 = vld [vmem:[%s198 + $0xc] sm:$0xf]
        %v283 = vld [vmem:[%s198 + $0x10] sm:$0xf]
        %v284 = vld [vmem:[%s198 + $0x14] sm:$0xf]
        %v285 = vld [vmem:[%s198 + $0x18] sm:$0xf]
        %v286 = vld [vmem:[%s198 + $0x1c] sm:$0xf]
        %v287 = vld [vmem:[%s198 + $0x20] sm:$0xf]
        %v288 = vld [vmem:[%s198 + $0x24] sm:$0xf]
        %v289 = vld [vmem:[%s198 + $0x28] sm:$0xf]
        %v290 = vld [vmem:[%s198 + $0x2c] sm:$0xf]
        %v291 = vld [vmem:[%s198 + $0x30] sm:$0xf]
        %v292 = vld [vmem:[%s198 + $0x34] sm:$0xf]
        %v293 = vld [vmem:[%s198 + $0x38] sm:$0xf]
        %v294 = vld [vmem:[%s198 + $0x3c] sm:$0xf]
        %v295 = vld [vmem:[%s198 + $0x40] sm:$0xf]
        %v296 = vld [vmem:[%s198 + $0x44] sm:$0xf]
        %v297 = vld [vmem:[%s198 + $0x48] sm:$0xf]
        %v298 = vld [vmem:[%s198 + $0x4c] sm:$0xf]
        %v299 = vld [vmem:[%s198 + $0x50] sm:$0xf]
        %v300 = vld [vmem:[%s198 + $0x54] sm:$0xf]
        %v301 = vld [vmem:[%s198 + $0x58] sm:$0xf]
        %v302 = vld [vmem:[%s198 + $0x5c] sm:$0xf]
        %v303 = vld [vmem:[%s198 + $0x60] sm:$0xf]
        %v304 = vld [vmem:[%s198 + $0x64] sm:$0xf]
        %v305 = vld [vmem:[%s198 + $0x68] sm:$0xf]
        %v306 = vld [vmem:[%s198 + $0x6c] sm:$0xf]
        %v307 = vld [vmem:[%s198 + $0x70] sm:$0xf]
        %v308 = vld [vmem:[%s198 + $0x74] sm:$0xf]
        %v309 = vld [vmem:[%s198 + $0x78] sm:$0xf]
        %v310 = vld [vmem:[%s198 + $0x7c] sm:$0xf]
        %v311 = vld [vmem:[%s207] sm:$0xf]
        %v312 = vld [vmem:[%s207 + $0x4] sm:$0xf]
        %v313 = vld [vmem:[%s207 + $0x8] sm:$0xf]
        %v314 = vld [vmem:[%s207 + $0xc] sm:$0xf]
        %v315 = vld [vmem:[%s207 + $0x10] sm:$0x3]
        %v348 = vunpack.c.l.b16 %v279
        %v349 = vunpack.c.l.b16 %v280
        %v350 = vunpack.c.l.b16 %v281
        %v351 = vunpack.c.l.b16 %v282
        %v352 = vunpack.c.l.b16 %v283
        %v353 = vunpack.c.l.b16 %v284
        %v354 = vunpack.c.l.b16 %v285
        %v355 = vunpack.c.l.b16 %v286
        %v356 = vunpack.c.l.b16 %v287
        %v357 = vunpack.c.l.b16 %v288
        %v358 = vunpack.c.l.b16 %v289
        %v359 = vunpack.c.l.b16 %v290
        %v360 = vunpack.c.l.b16 %v291
        %v361 = vunpack.c.l.b16 %v292
        %v362 = vunpack.c.l.b16 %v293
        %v363 = vunpack.c.l.b16 %v294
        %v364 = vunpack.c.l.b16 %v295
        %v365 = vunpack.c.l.b16 %v296
        %v366 = vunpack.c.l.b16 %v297
        %v367 = vunpack.c.l.b16 %v298
        %v368 = vunpack.c.l.b16 %v299
        %v369 = vunpack.c.l.b16 %v300
        %v370 = vunpack.c.l.b16 %v301
        %v371 = vunpack.c.l.b16 %v302
        %v372 = vunpack.c.l.b16 %v303
        %v373 = vunpack.c.l.b16 %v304
        %v374 = vunpack.c.l.b16 %v305
        %v375 = vunpack.c.l.b16 %v306
        %v376 = vunpack.c.l.b16 %v307
        %v377 = vunpack.c.l.b16 %v308
        %v378 = vunpack.c.l.b16 %v309
        %v379 = vunpack.c.l.b16 %v310
        %v380 = vpack.c.b16 %v349, %v348
        %v381 = vpack.c.b16 %v351, %v350
        %v382 = vpack.c.b16 %v353, %v352
        %v383 = vpack.c.b16 %v355, %v354
        %v384 = vpack.c.b16 %v357, %v356
        %v385 = vpack.c.b16 %v359, %v358
        %v386 = vpack.c.b16 %v361, %v360
        %v387 = vpack.c.b16 %v363, %v362
        %v388 = vpack.c.b16 %v365, %v364
        %v389 = vpack.c.b16 %v367, %v366
        %v390 = vpack.c.b16 %v369, %v368
        %v391 = vpack.c.b16 %v371, %v370
        %v392 = vpack.c.b16 %v373, %v372
        %v393 = vpack.c.b16 %v375, %v374
        %v394 = vpack.c.b16 %v377, %v376
        %v395 = vpack.c.b16 %v379, %v378
        %v401 = vunpack.c.l.b16 %v311
        %v402 = vunpack.c.l.b16 %v312
        %v403 = vunpack.c.l.b16 %v313
        %v404 = vunpack.c.l.b16 %v314
        %v405 = vunpack.c.l.b16 %v315
        %v406 = vpack.c.b16 %v402, %v401
        %v407 = vpack.c.b16 %v404, %v403
        %v408 = vpack.c.b16 %v405, %v405
        %vm411 = vcmask 293888
        %v413 = vsel %vm411, %v380, 0
        %v416 = vsel %vm411, %v381, 0
        %v419 = vsel %vm411, %v382, 0
        %v422 = vsel %vm411, %v383, 0
        %v425 = vsel %vm411, %v384, 0
        %v428 = vsel %vm411, %v385, 0
        %v431 = vsel %vm411, %v386, 0
        %v434 = vsel %vm411, %v387, 0
        %v437 = vsel %vm411, %v388, 0
        %v440 = vsel %vm411, %v389, 0
        %v443 = vsel %vm411, %v390, 0
        %v446 = vsel %vm411, %v391, 0
        %v449 = vsel %vm411, %v392, 0
        %v452 = vsel %vm411, %v393, 0
        %v455 = vsel %vm411, %v394, 0
        %v458 = vsel %vm411, %v395, 0
        %vm460 = vcmask 1041408
        %v462 = vsel %vm460, %v408, 0
        %464 = vmatprep.subr.bf16.mxu0 0
        %465 = vmatpush1.bf16.msra.mxu0 %v406
        %466 = vmatprep.subr.bf16.mxu0 0
        %467 = vmatpush1.bf16.msra.mxu0 %v407
        %468 = vmatprep.subr.bf16.mxu0 0
        %469 = vmatpush1.bf16.msra.mxu0 %v462
        %470 = vmatprep.subr.bf16.mxu0 0
        %471 = vmatpush1.bf16.msra.mxu0 0
        %472 = vmatprep.subr.bf16.mxu0 0
        %473 = vmatpush1.bf16.msra.mxu0 0
        %474 = vmatprep.subr.bf16.mxu0 0
        %475 = vmatpush1.bf16.msra.mxu0 0
        %476 = vmatprep.subr.bf16.mxu0 0
        %477 = vmatpush1.bf16.msra.mxu0 0
        %478 = vmatprep.subr.bf16.mxu0 0
        %479 = vmatpush1.bf16.msra.mxu0 0
        %480 = vmatprep.subr.bf16.mxu0 0
        %481 = vmatpush1.bf16.msra.mxu0 0
        %482 = vmatprep.subr.bf16.mxu0 0
        %483 = vmatpush1.bf16.msra.mxu0 0
        %484 = vmatprep.subr.bf16.mxu0 0
        %485 = vmatpush1.bf16.msra.mxu0 0
        %486 = vmatprep.subr.bf16.mxu0 0
        %487 = vmatpush1.bf16.msra.mxu0 0
        %488 = vmatprep.subr.bf16.mxu0 0
        %489 = vmatpush1.bf16.msra.mxu0 0
        %490 = vmatprep.subr.bf16.mxu0 0
        %491 = vmatpush1.bf16.msra.mxu0 0
        %492 = vmatprep.subr.bf16.mxu0 0
        %493 = vmatpush1.bf16.msra.mxu0 0
        %494 = vmatprep.subr.bf16.mxu0 0
        %495 = vmatpush1.bf16.msra.mxu0 0
        %496 = vmatprep.mubr.bf16.mxu0 0
        %497 = vmatmul.mubr.bf16.gmra.mrb[0].mxu0 %v413
        %v498 = vpop.f32.mrb[0].mxu0
        %v499 = vadd.f32 0.0, %v498
        %v500 = vpop.f32.mrb[0].mxu0
        %v501 = vpop.f32.mrb[0].mxu0
        %v502 = vadd.f32 0.0, %v501
        %v503 = vpop.f32.mrb[0].mxu0
        %504 = vmatprep.mubr.bf16.mxu0 0
        %505 = vmatmul.mubr.bf16.gmra.mrb[0].mxu0 %v416
        %v506 = vpop.f32.mrb[0].mxu0
        %v507 = vadd.f32 0.0, %v506
        %v508 = vpop.f32.mrb[0].mxu0
        %v509 = vpop.f32.mrb[0].mxu0
        %v510 = vadd.f32 0.0, %v509
        %v511 = vpop.f32.mrb[0].mxu0
        %512 = vmatprep.mubr.bf16.mxu0 0
        %513 = vmatmul.mubr.bf16.gmra.mrb[0].mxu0 %v419
        %v514 = vpop.f32.mrb[0].mxu0
        %v515 = vadd.f32 0.0, %v514
        %v516 = vpop.f32.mrb[0].mxu0
        %v517 = vpop.f32.mrb[0].mxu0
        %v518 = vadd.f32 0.0, %v517
        %v519 = vpop.f32.mrb[0].mxu0
        %520 = vmatprep.mubr.bf16.mxu0 0
        %521 = vmatmul.mubr.bf16.gmra.mrb[0].mxu0 %v422
        %v522 = vpop.f32.mrb[0].mxu0
        %v523 = vadd.f32 0.0, %v522
        %v524 = vpop.f32.mrb[0].mxu0
        %v525 = vpop.f32.mrb[0].mxu0
        %v526 = vadd.f32 0.0, %v525
        %v527 = vpop.f32.mrb[0].mxu0
        %528 = vmatprep.mubr.bf16.mxu0 0
        %529 = vmatmul.mubr.bf16.gmra.mrb[0].mxu0 %v425
        %v530 = vpop.f32.mrb[0].mxu0
        %v531 = vadd.f32 0.0, %v530
        %v532 = vpop.f32.mrb[0].mxu0
        %v533 = vpop.f32.mrb[0].mxu0
        %v534 = vadd.f32 0.0, %v533
        %v535 = vpop.f32.mrb[0].mxu0
        %536 = vmatprep.mubr.bf16.mxu0 0
        %537 = vmatmul.mubr.bf16.gmra.mrb[0].mxu0 %v428
        %v538 = vpop.f32.mrb[0].mxu0
        %v539 = vadd.f32 0.0, %v538
        %v540 = vpop.f32.mrb[0].mxu0
        %v541 = vpop.f32.mrb[0].mxu0
        %v542 = vadd.f32 0.0, %v541
        %v543 = vpop.f32.mrb[0].mxu0
        %544 = vmatprep.mubr.bf16.mxu0 0
        %545 = vmatmul.mubr.bf16.gmra.mrb[0].mxu0 %v431
        %v546 = vpop.f32.mrb[0].mxu0
        %v547 = vadd.f32 0.0, %v546
        %v548 = vpop.f32.mrb[0].mxu0
        %v549 = vpop.f32.mrb[0].mxu0
        %v550 = vadd.f32 0.0, %v549
        %v551 = vpop.f32.mrb[0].mxu0
        %552 = vmatprep.mubr.bf16.mxu0 0
        %553 = vmatmul.mubr.bf16.gmra.mrb[0].mxu0 %v434
        %v554 = vpop.f32.mrb[0].mxu0
        %v555 = vadd.f32 0.0, %v554
        %v556 = vpop.f32.mrb[0].mxu0
        %v557 = vpop.f32.mrb[0].mxu0
        %v558 = vadd.f32 0.0, %v557
        %v559 = vpop.f32.mrb[0].mxu0
        %560 = vmatprep.mubr.bf16.mxu0 0
        %561 = vmatmul.mubr.bf16.gmra.mrb[0].mxu0 %v437
        %v562 = vpop.f32.mrb[0].mxu0
        %v563 = vadd.f32 0.0, %v562
        %v564 = vpop.f32.mrb[0].mxu0
        %v565 = vpop.f32.mrb[0].mxu0
        %v566 = vadd.f32 0.0, %v565
        %v567 = vpop.f32.mrb[0].mxu0
        %568 = vmatprep.mubr.bf16.mxu0 0
        %569 = vmatmul.mubr.bf16.gmra.mrb[0].mxu0 %v440
        %v570 = vpop.f32.mrb[0].mxu0
        %v571 = vadd.f32 0.0, %v570
        %v572 = vpop.f32.mrb[0].mxu0
        %v573 = vpop.f32.mrb[0].mxu0
        %v574 = vadd.f32 0.0, %v573
        %v575 = vpop.f32.mrb[0].mxu0
        %576 = vmatprep.mubr.bf16.mxu0 0
        %577 = vmatmul.mubr.bf16.gmra.mrb[0].mxu0 %v443
        %v578 = vpop.f32.mrb[0].mxu0
        %v579 = vadd.f32 0.0, %v578
        %v580 = vpop.f32.mrb[0].mxu0
        %v581 = vpop.f32.mrb[0].mxu0
        %v582 = vadd.f32 0.0, %v581
        %v583 = vpop.f32.mrb[0].mxu0
        %584 = vmatprep.mubr.bf16.mxu0 0
        %585 = vmatmul.mubr.bf16.gmra.mrb[0].mxu0 %v446
        %v586 = vpop.f32.mrb[0].mxu0
        %v587 = vadd.f32 0.0, %v586
        %v588 = vpop.f32.mrb[0].mxu0
        %v589 = vpop.f32.mrb[0].mxu0
        %v590 = vadd.f32 0.0, %v589
        %v591 = vpop.f32.mrb[0].mxu0
        %592 = vmatprep.mubr.bf16.mxu0 0
        %593 = vmatmul.mubr.bf16.gmra.mrb[0].mxu0 %v449
        %v594 = vpop.f32.mrb[0].mxu0
        %v595 = vadd.f32 0.0, %v594
        %v596 = vpop.f32.mrb[0].mxu0
        %v597 = vpop.f32.mrb[0].mxu0
        %v598 = vadd.f32 0.0, %v597
        %v599 = vpop.f32.mrb[0].mxu0
        %600 = vmatprep.mubr.bf16.mxu0 0
        %601 = vmatmul.mubr.bf16.gmra.mrb[0].mxu0 %v452
        %v602 = vpop.f32.mrb[0].mxu0
        %v603 = vadd.f32 0.0, %v602
        %v604 = vpop.f32.mrb[0].mxu0
        %v605 = vpop.f32.mrb[0].mxu0
        %v606 = vadd.f32 0.0, %v605
        %v607 = vpop.f32.mrb[0].mxu0
        %608 = vmatprep.mubr.bf16.mxu0 0
        %609 = vmatmul.mubr.bf16.gmra.mrb[0].mxu0 %v455
        %v610 = vpop.f32.mrb[0].mxu0
        %v611 = vadd.f32 0.0, %v610
        %v612 = vpop.f32.mrb[0].mxu0
        %v613 = vpop.f32.mrb[0].mxu0
        %v614 = vadd.f32 0.0, %v613
        %v615 = vpop.f32.mrb[0].mxu0
        %616 = vmatprep.mubr.bf16.mxu0 0
        %617 = vmatmul.mubr.bf16.gmra.mrb[0].mxu0 %v458
        %v618 = vpop.f32.mrb[0].mxu0
        %v619 = vadd.f32 0.0, %v618
        %v620 = vpop.f32.mrb[0].mxu0
        %v621 = vpop.f32.mrb[0].mxu0
        %v622 = vadd.f32 0.0, %v621
        %v623 = vpop.f32.mrb[0].mxu0
        %624 = vdwg.mxu0
        %v625 = vadd.f32 %v247, %v499
        %v626 = vadd.f32 %v248, %v502
        %v627 = vadd.f32 %v249, %v507
        %v628 = vadd.f32 %v250, %v510
        %v629 = vadd.f32 %v251, %v515
        %v630 = vadd.f32 %v252, %v518
        %v631 = vadd.f32 %v253, %v523
        %v632 = vadd.f32 %v254, %v526
        %v633 = vadd.f32 %v255, %v531
        %v634 = vadd.f32 %v256, %v534
        %v635 = vadd.f32 %v257, %v539
        %v636 = vadd.f32 %v258, %v542
        %v637 = vadd.f32 %v259, %v547
        %v638 = vadd.f32 %v260, %v550
        %v639 = vadd.f32 %v261, %v555
        %v640 = vadd.f32 %v262, %v558
        %v641 = vadd.f32 %v263, %v563
        %v642 = vadd.f32 %v264, %v566
        %v643 = vadd.f32 %v265, %v571
        %v644 = vadd.f32 %v266, %v574
        %v645 = vadd.f32 %v267, %v579
        %v646 = vadd.f32 %v268, %v582
        %v647 = vadd.f32 %v269, %v587
        %v648 = vadd.f32 %v270, %v590
        %v649 = vadd.f32 %v271, %v595
        %v650 = vadd.f32 %v272, %v598
        %v651 = vadd.f32 %v273, %v603
        %v652 = vadd.f32 %v274, %v606
        %v653 = vadd.f32 %v275, %v611
        %v654 = vadd.f32 %v276, %v614
        %v655 = vadd.f32 %v277, %v619
        %v656 = vadd.f32 %v278, %v622
        %657 = vst [vmem:[%s190] sm:$0xff] %v625
        %658 = vst [vmem:[%s190 + $0x8] sm:$0xff] %v626
        %659 = vst [vmem:[%s190 + $0x10] sm:$0xff] %v627
        %660 = vst [vmem:[%s190 + $0x18] sm:$0xff] %v628
        %661 = vst [vmem:[%s190 + $0x20] sm:$0xff] %v629
        %662 = vst [vmem:[%s190 + $0x28] sm:$0xff] %v630
        %663 = vst [vmem:[%s190 + $0x30] sm:$0xff] %v631
        %664 = vst [vmem:[%s190 + $0x38] sm:$0xff] %v632
        %665 = vst [vmem:[%s190 + $0x40] sm:$0xff] %v633
        %666 = vst [vmem:[%s190 + $0x48] sm:$0xff] %v634
        %667 = vst [vmem:[%s190 + $0x50] sm:$0xff] %v635
        %668 = vst [vmem:[%s190 + $0x58] sm:$0xff] %v636
        %669 = vst [vmem:[%s190 + $0x60] sm:$0xff] %v637
        %670 = vst [vmem:[%s190 + $0x68] sm:$0xff] %v638
        %671 = vst [vmem:[%s190 + $0x70] sm:$0xff] %v639
        %672 = vst [vmem:[%s190 + $0x78] sm:$0xff] %v640
        %673 = vst [vmem:[%s190 + $0x80] sm:$0xff] %v641
        %674 = vst [vmem:[%s190 + $0x88] sm:$0xff] %v642
        %675 = vst [vmem:[%s190 + $0x90] sm:$0xff] %v643
        %676 = vst [vmem:[%s190 + $0x98] sm:$0xff] %v644
        %677 = vst [vmem:[%s190 + $0xa0] sm:$0xff] %v645
        %678 = vst [vmem:[%s190 + $0xa8] sm:$0xff] %v646
        %679 = vst [vmem:[%s190 + $0xb0] sm:$0xff] %v647
        %680 = vst [vmem:[%s190 + $0xb8] sm:$0xff] %v648
        %681 = vst [vmem:[%s190 + $0xc0] sm:$0xff] %v649
        %682 = vst [vmem:[%s190 + $0xc8] sm:$0xff] %v650
        %683 = vst [vmem:[%s190 + $0xd0] sm:$0xff] %v651
        %684 = vst [vmem:[%s190 + $0xd8] sm:$0xff] %v652
        %685 = vst [vmem:[%s190 + $0xe0] sm:$0xff] %v653
        %686 = vst [vmem:[%s190 + $0xe8] sm:$0xff] %v654
        %687 = vst [vmem:[%s190 + $0xf0] sm:$0xff] %v655
        %688 = vst [vmem:[%s190 + $0xf8] sm:$0xff] %v656
        %s689 = sand.u32 %s101, 1
        %s690 = scalar_lea.sflag [#allocation3], %s689
        %s691 = sand.u32 %s101, 1
        %s692 = smul.addr %s691, 256
        %s693 = scalar_lea.vmem [#allocation2], %s692
        // Predicated region
        $region33: #{tpu_custom_call.1} parent=27 // pred_check
          %p694 = pneg %p111
        $region34: #{tpu_custom_call.1} parent=27 // pred_check_branch
          %696 = sbr.rel (%p694) target = $region36
        $region35: #{tpu_custom_call.1} parent=27 // pred_region
          %s697 = smul.u32 32, %s21
          %s699 = ssub.s32 4096, 4096
          %700 = vsyncadd %s690, %s699
          %s701 = sadd.s32 %s22, %s697
          %s702 = smul.addr %s701, 128
          %s703 = scalar_lea.hbm %s2, %s702
          %s704 = sshll.u32 %s693, 4
          %s705 = int_to_ptr.vmem [resolvable:$true] %s704
          %710 = dma.vmem_to_hbm [thread:$0]  %s705, 4096, %s703, %s690, 128, 128, 8
        $region36: #{tpu_custom_call.1} parent=27 // pred_fallthru
          _
      $region28: #{tpu_custom_call.1} parent=5 // pred_fallthru
        _
      %p711 = scmp.le.s32.totalorder 2, %s11
      // Predicated region
      $region37: #{tpu_custom_call.1} parent=5 // pred_check
        %p712 = pneg %p711
      $region38: #{tpu_custom_call.1} parent=5 // pred_check_branch
        %714 = sbr.rel (%p712) target = $region40
      $region39: #{tpu_custom_call.1} parent=5 // pred_region
        %s715 = ssub.s32 %s11, 2
        // Predicated region
        $region41: #{tpu_custom_call.1} parent=39 // pred_check
          %p716 = pneg %p117
        $region42: #{tpu_custom_call.1} parent=39 // pred_check_branch
          %718 = sbr.rel (%p716) target = $region44
        $region43: #{tpu_custom_call.1} parent=39 // pred_region
          %s719 = sand.u32 %s102, 1
          %s720 = scalar_lea.sflag [#allocation3], %s719
          %s721 = sand.u32 %s102, 1
          %s722 = smul.addr %s721, 256
          %s723 = scalar_lea.vmem [#allocation2], %s722
          %724 = dma.done %s720, 4096
        $region44: #{tpu_custom_call.1} parent=39 // pred_fallthru
          _
      $region40: #{tpu_custom_call.1} parent=5 // pred_fallthru
        _
    $region6: #{tpu_custom_call.1} parent=1 // loop_footer
      %s15 = sadd.s32 1, %s11
    $region7: #{tpu_custom_call.1} parent=1 // loop_footer_branch
      %10 = sbr.rel target = $region3
    $region8: #{tpu_custom_call.1} parent=1 // loop_exit
      _
    %725 = vsyncpa [#allocation3], 1
    %s726 = scalar_lea.sflag [#allocation3], 1
    %727 = vsyncpa %s726, 1

</llo_original>
